<compile_context>
chip_gen: v5e
topology: v5e:2x2
jax: 0.10.0
libtpu: 0.0.40
codegen_flags: <defaults>
</compile_context>

<pallas_src>
import jax
import jax.numpy as jnp
from jax.experimental import pallas as pl
from jax.experimental.pallas import tpu as pltpu

_K = 4        # feature dim of the module (x_param is [4, 1])
_GROUP = 32   # original A rows packed into one lane-dense (128-lane) row


def _small_matvec_kernel(a_ref, x_ref, o_ref):
    """Whole-problem kernel for small N and the <32-row ragged tail.

    a_ref: (n, 4); x_ref: (4, 1); o_ref: (1, n) lane-dense output row.
    Pure VPU: transpose the tiny block, broadcast-multiply, reduce 4 sublanes.
    """
    a = a_ref[...].astype(jnp.float32)
    x = x_ref[...].astype(jnp.float32)
    at = jnp.transpose(a)                                   # (4, n)
    o_ref[...] = jnp.sum(at * x, axis=0, keepdims=True).astype(o_ref.dtype)


def _lane_dense_matvec_kernel(a_ref, xt_ref, o_ref):
    """Main kernel: A reinterpreted as (N//32, 128) lane-dense rows.

    Lane l of a reshaped row g holds A[32*g + l//4, l%4]; xt_ref is x tiled
    32x along lanes, so prod[:, l] = A[row, l%4] * x[l%4].  Two lane-rolls
    reduce each aligned group of 4 lanes (group sum lands on lane 4j), then a
    5-stage roll+select compaction moves lane 4j -> lane j.  Exact f32 on the
    VPU/XLU; the MXU is idle (memory-bound kernel).
    """
    a = a_ref[...].astype(jnp.float32)                       # (br, 128)
    prod = a * xt_ref[...].astype(jnp.float32)               # bcast over sublanes

    # Group-of-4 lane reduction: s[l] = prod[l] + prod[l+1] + prod[l+2] + prod[l+3]
    s = prod + pltpu.roll(prod, 127, axis=1)                 # roll by -1
    s = s + pltpu.roll(s, 126, axis=1)                       # roll by -2

    # Compact lane 4j -> lane j (j = 0..31) in 5 roll+select stages.  At stage
    # k, every element whose group index j has bit k set shifts left by 3*2^k;
    # its destination lane has bit k set, while elements that stay put sit on
    # lanes with bit k clear, so a per-lane select on bit k of the destination
    # lane index is exact and collision-free.
    lane = jax.lax.broadcasted_iota(jnp.int32, (1, _GROUP * _K), 1)
    cur = s
    for k in range(5):
        shifted = pltpu.roll(cur, 128 - 3 * (1 << k), axis=1)   # left by 3*2^k
        take = (lane & (1 << k)) != 0
        cur = jnp.where(take, shifted, cur)                     # true select (NaN-safe)

    o_ref[...] = cur[:, :_GROUP].astype(o_ref.dtype)


def _round_up(x, m):
    return (x + m - 1) // m * m


def _small_matvec(a, x_param):
    """No-grid path: whole problem in VMEM with a single kernel invocation."""
    n = a.shape[0]
    out_row = pl.pallas_call(
        _small_matvec_kernel,
        out_shape=jax.ShapeDtypeStruct((1, n), a.dtype),
        in_specs=[
            pl.BlockSpec(memory_space=pltpu.MemorySpace.VMEM),
            pl.BlockSpec(memory_space=pltpu.MemorySpace.VMEM),
        ],
        out_specs=pl.BlockSpec(memory_space=pltpu.MemorySpace.VMEM),
    )(a, x_param)
    return out_row.reshape(n, 1)


def my_model_forward(a, x_param, *, block_rows=4096, small_n=512):
    """Pallas equivalent of MyModel.forward: A [N, 4] @ x_param [4, 1] -> [N, 1]."""
    n, k = a.shape
    assert k == _K and x_param.shape == (_K, 1)
    assert block_rows % 8 == 0

    if n < max(small_n, _GROUP):
        return _small_matvec(a, x_param)

    n_groups = n // _GROUP               # full groups of 32 rows
    rem = n - n_groups * _GROUP          # ragged tail (< 32 rows)

    # Free, contiguous reinterpretation of the 32-aligned prefix: lane l of
    # reshaped row g is A[32*g + l//4, l%4].  When rem == 0 this is a pure
    # bitcast; only when rem > 0 does the prefix slice materialize (no jnp.pad
    # over the whole of A anymore).
    a_main = a if rem == 0 else a[: n_groups * _GROUP]
    a2 = a_main.reshape(n_groups, _GROUP * _K)               # (n_groups, 128)

    # x tiled across the 128 lanes so it lines up with the interleaved features.
    xt = jnp.tile(x_param.reshape(1, _K), (1, _GROUP)).astype(a.dtype)  # (1, 128)

    br = min(block_rows, _round_up(n_groups, 8))
    grid = (pl.cdiv(n_groups, br),)                          # partial last block is masked

    out2 = pl.pallas_call(
        _lane_dense_matvec_kernel,
        out_shape=jax.ShapeDtypeStruct((n_groups, _GROUP), a.dtype),
        grid=grid,
        in_specs=[
            pl.BlockSpec((br, _GROUP * _K), lambda i: (i, 0)),   # 2 MiB lane-dense A blocks
            pl.BlockSpec((1, _GROUP * _K), lambda i: (0, 0)),    # x_tiled stays VMEM-resident
        ],
        out_specs=pl.BlockSpec((br, _GROUP), lambda i: (i, 0)),
        compiler_params=pltpu.CompilerParams(
            dimension_semantics=("parallel",),                   # megacore / dual-TC split
            vmem_limit_bytes=48 * 1024 * 1024,
        ),
    )(a2, xt)

    out_main = out2.reshape(n_groups * _GROUP, 1)                # free reshape
    if rem == 0:
        return out_main
    tail = _small_matvec(a[n_groups * _GROUP:], x_param)         # <32 rows, tiny
    return jnp.concatenate([out_main, tail], axis=0)


if __name__ == "__main__":
    key = jax.random.PRNGKey(0)
    k_small, k_mid, k_big = jax.random.split(key, 3)

    # Module parameter: nn.Parameter(torch.ones([4, 1])) -> deterministic ones.
    x_param = jnp.ones((_K, 1), dtype=jnp.float32)

    def ref_matvec(a):
        # Exact f32 elementwise reference (avoids XLA's default low-precision
        # matmul passes so the comparison tolerance can stay tight).
        return jnp.sum(a * x_param.reshape(1, _K), axis=1, keepdims=True)

    # Small batch (the module's nominal use): no-grid path.
    a_small = jax.random.normal(k_small, (8, _K), dtype=jnp.float32)
    out_small = jax.block_until_ready(my_model_forward(a_small, x_param))
    assert out_small.shape == (8, 1)
    assert jnp.allclose(out_small, ref_matvec(a_small), atol=1e-4, rtol=1e-4)

    # Mid size, 32-aligned: lane-dense path, single block, no tail, no copies.
    a_mid = jax.random.normal(k_mid, (8192, _K), dtype=jnp.float32)
    out_mid = jax.block_until_ready(my_model_forward(a_mid, x_param))
    assert out_mid.shape == (8192, 1)
    assert jnp.allclose(out_mid, ref_matvec(a_mid), atol=1e-4, rtol=1e-4)

    # Larger, non-32-aligned: multi-step grid + masked partial edge block +
    # ragged 8-row tail through the no-grid kernel.
    a_big = jax.random.normal(k_big, (41000, _K), dtype=jnp.float32)
    out_big = jax.block_until_ready(my_model_forward(a_big, x_param, block_rows=256))
    assert out_big.shape == (41000, 1)
    assert jnp.allclose(out_big, ref_matvec(a_big), atol=1e-4, rtol=1e-4)

    print("KERNEL_OK")
</pallas_src>

<mosaic_0001>
module attributes {stable_mosaic.version = 11 : i64} {
  func.func @_small_matvec_kernel(%arg0: memref<8x4xf32, #tpu.memory_space<vmem>>, %arg1: memref<4x1xf32, #tpu.memory_space<vmem>>, %arg2: memref<1x8xf32, #tpu.memory_space<vmem>>) attributes {dimension_semantics = [], scalar_prefetch = 0 : i64, scratch_operands = 0 : i64, tpu.core_type = #tpu.core_type<tc>} {
    %c0 = arith.constant 0 : index
    %c0_0 = arith.constant 0 : index
    %0 = vector.load %arg0[%c0, %c0_0] : memref<8x4xf32, #tpu.memory_space<vmem>>, vector<8x4xf32>
    %c0_1 = arith.constant 0 : index
    %c0_2 = arith.constant 0 : index
    %1 = vector.load %arg1[%c0_1, %c0_2] : memref<4x1xf32, #tpu.memory_space<vmem>>, vector<4x1xf32>
    %2 = tpu.transpose %0, [1, 0] : vector<8x4xf32> -> vector<4x8xf32>
    %3 = vector.broadcast %1 : vector<4x1xf32> to vector<4x8xf32>
    %4 = arith.mulf %2, %3 : vector<4x8xf32>
    %cst = arith.constant dense<0.000000e+00> : vector<8xf32>
    %5 = vector.multi_reduction <add>, %4, %cst [0] : vector<4x8xf32> to vector<8xf32>
    %6 = vector.shape_cast %5 : vector<8xf32> to vector<1x8xf32>
    %c0_3 = arith.constant 0 : index
    %c0_4 = arith.constant 0 : index
    %7 = vector.load %arg2[%c0_3, %c0_4] : memref<1x8xf32, #tpu.memory_space<vmem>>, vector<1x8xf32>
    tpu.vector_store %arg2[%c0_3, %c0_4], %6 {strides = array<i32>} : memref<1x8xf32, #tpu.memory_space<vmem>>, vector<1x8xf32>,
    return
  }
}

</mosaic_0001>

<llo_original>
// kernel: tpu_custom_call.1
$region0: #{tpu_custom_call.1}
  #allocation0 [shape = 'u32[]', space=smem, size = 0x4, offset = 0x4, fixed_abs, tag = 'smem constant byte address 0x4 - core index']
  #allocation1 [shape = 'u32[72,128]{1,0:T(1,128)}', space=vmem, size = 0x9000, scoped, tag = 'internal scratch']
  %s0 = inlined_call_operand.vmem [shape: f32[8,4], index: 0, kind: input, shape index: {}]
  %s1 = inlined_call_operand.vmem [shape: f32[4,1], index: 1, kind: input, shape index: {}]
  %s2 = inlined_call_operand.hbm [shape: f32[1,8], index: 2, kind: output, shape index: {}]
  %s3 = sld [smem:[#allocation0]]
  $region18: #{tpu_custom_call.1} parent=0
    _
  %s5 = ssub.s32 1, %s3
  %s6 = scalar_select 0, %s5, %s3
  $region1: #{tpu_custom_call.1} parent=0
    #allocation2 [shape = 'u8[512]{0}', space=vmem, size = 0x400, scoped, tag = 'output window, operand 0, single buffered']
    #allocation3 [shape = 's32[1]{0}', space=sflag, size = 0x4, scoped, tag = 'scoped memory for tpu_custom_call.1']
    %7 = vsyncpa [#allocation3], 0
    // Predicated region
    $region2: #{tpu_custom_call.1} parent=1 // pred_check
      _
    $region3: #{tpu_custom_call.1} parent=1 // pred_check_branch
      %9 = sbr.rel (0) target = $region5
    $region4: #{tpu_custom_call.1} parent=1 // pred_region
      _
    $region5: #{tpu_custom_call.1} parent=1 // pred_fallthru
      _
    // Predicated region
    $region6: #{tpu_custom_call.1} parent=1 // pred_check
      _
    $region7: #{tpu_custom_call.1} parent=1 // pred_check_branch
      %11 = sbr.rel (0) target = $region9
    $region8: #{tpu_custom_call.1} parent=1 // pred_region
      _
    $region9: #{tpu_custom_call.1} parent=1 // pred_fallthru
      _
    %v12 = vld [vmem:[%s0] sm:$0xff]
    %v13 = vld [vmem:[%s1] sm:$0xf]
    %14 = vxpose.xlu0.b32.start [1/16] %v12, 128
    %15 = vxpose.xlu0.b32.cont [2/16] 0.0, 128
    %16 = vxpose.xlu0.b32.cont [3/16] 0.0, 128
    %17 = vxpose.xlu0.b32.cont [4/16] 0.0, 128
    %18 = vxpose.xlu0.b32.cont [5/16] 0.0, 128
    %19 = vxpose.xlu0.b32.cont [6/16] 0.0, 128
    %20 = vxpose.xlu0.b32.cont [7/16] 0.0, 128
    %21 = vxpose.xlu0.b32.cont [8/16] 0.0, 128
    %22 = vxpose.xlu0.b32.cont [9/16] 0.0, 128
    %23 = vxpose.xlu0.b32.cont [10/16] 0.0, 128
    %24 = vxpose.xlu0.b32.cont [11/16] 0.0, 128
    %25 = vxpose.xlu0.b32.cont [12/16] 0.0, 128
    %26 = vxpose.xlu0.b32.cont [13/16] 0.0, 128
    %27 = vxpose.xlu0.b32.cont [14/16] 0.0, 128
    %28 = vxpose.xlu0.b32.cont [15/16] 0.0, 128
    %29 = vxpose.xlu0.b32.end [16/16] 0.0, 128
    %v30 = vpop.trf.xlu0
    %v31 = vpop.trf.xlu0
    %v32 = vpop.trf.xlu0
    %v33 = vpop.trf.xlu0
    %v34 = vpop.trf.xlu0
    %v35 = vpop.trf.xlu0
    %v36 = vpop.trf.xlu0
    %v37 = vpop.trf.xlu0
    %v38 = vpop.trf.xlu0
    %v39 = vpop.trf.xlu0
    %v40 = vpop.trf.xlu0
    %v41 = vpop.trf.xlu0
    %v42 = vpop.trf.xlu0
    %v43 = vpop.trf.xlu0
    %v44 = vpop.trf.xlu0
    %v45 = vpop.trf.xlu0
    %47 = vset.pattern.permute.xlu0 0
    %48 = vperm.xlu0 %47, %v13
    %v49 = vpop.permute.xlu0 %48
    %v51 = vmul.f32 %v30, %v49
    %vm52 = vcmask 60416
    %v53 = vsel %vm52, %v51, 0.0
    %v54 = vrot.slane %v53, 4
    %v55 = vadd.f32 %v53, %v54
    %v56 = vrot.slane %v55, 2
    %v57 = vadd.f32 %v55, %v56
    %v58 = vrot.slane %v57, 1
    %v59 = vadd.f32 %v57, %v58
    %vm60 = vcmask 57344
    %61 = vst.msk [vmem:[#allocation2] sm:$0x1] %vm60, %v59
    // Predicated region
    $region10: #{tpu_custom_call.1} parent=1 // pred_check
      _
    $region11: #{tpu_custom_call.1} parent=1 // pred_check_branch
      %63 = sbr.rel (0) target = $region13
    $region12: #{tpu_custom_call.1} parent=1 // pred_region
      %65 = vsyncadd [#allocation3], 0
      %s67 = sshll.u32 [#allocation2], 4
      %s68 = int_to_ptr.vmem [resolvable:$true] %s67
      %s69 = sshll.u32 %s2, 4
      %s70 = int_to_ptr.hbm [resolvable:$true] %s69
      %72 = dma.vmem_to_hbm [thread:$0]  %s68, 16, %s70, [#allocation3]
    $region13: #{tpu_custom_call.1} parent=1 // pred_fallthru
      _
    // Predicated region
    $region14: #{tpu_custom_call.1} parent=1 // pred_check
      _
    $region15: #{tpu_custom_call.1} parent=1 // pred_check_branch
      %74 = sbr.rel (0) target = $region17
    $region16: #{tpu_custom_call.1} parent=1 // pred_region
      %76 = dma.done [#allocation3], 16
    $region17: #{tpu_custom_call.1} parent=1 // pred_fallthru
      _
    %77 = vsyncpa [#allocation3], 1

</llo_original>
